<compile_context>
chip_gen: v7x
topology: tpu7x:2x2x1
jax: 0.10.0
libtpu: 0.0.40
codegen_flags: <defaults>
</compile_context>

<pallas_src>
import jax
import jax.numpy as jnp
from jax.experimental import pallas as pl
from jax.experimental.pallas import tpu as pltpu

_IN = 2          # logical input features
_FEAT = 128      # hidden features padded 100 -> 128 (lane aligned)
_NEG_SLOPE = 0.01


def _leaky_relu(x):
    # max(x, 0.01*x) == LeakyReLU(0.01) for slope < 1; saves the compare/select.
    return jnp.maximum(x, _NEG_SLOPE * x)


def discriminator_kernel(x_ref, w1_ref, b1_ref, w2_ref, b2_ref, w3_ref, b3_ref,
                         out_ref):
    x = x_ref[...]            # (tm, 2)   f32
    w1 = w1_ref[...]          # (2, 128)  f32

    # Layer 1: K=2 contraction -> two broadcast FMAs on the VPU (no MXU pass).
    h1 = x[:, 0:1] * w1[0:1, :] + x[:, 1:2] * w1[1:2, :] + b1_ref[...]
    h1 = _leaky_relu(h1)

    # Layer 2: bf16 operands, f32 accumulation on the MXU.
    h2 = jnp.dot(h1.astype(jnp.bfloat16), w2_ref[...],
                 preferred_element_type=jnp.float32) + b2_ref[...]
    h2 = _leaky_relu(h2)

    # Layer 3: MXU pass; only column 0 of the padded w3/b3 is real.
    h3 = jnp.dot(h2.astype(jnp.bfloat16), w3_ref[...],
                 preferred_element_type=jnp.float32) + b3_ref[...]
    z = h3[:, 0:1]            # (tm, 1) real logit column

    # Sigmoid on the narrow column only: exp + approx reciprocal hit the EUP slot.
    out_ref[...] = pl.reciprocal(1.0 + jnp.exp(-z),
                                 approx=True).astype(out_ref.dtype)


def _round_up(n, m):
    return ((n + m - 1) // m) * m


def discriminator_forward(x, params, *, block_rows=4096):
    """x: (B, 2) float32 -> (B, 1) float32."""
    B = x.shape[0]
    # Batch tile: multiple of 8, large enough to amortize per-step overhead,
    # but capped at ~ceil(B/2) so the grid has >=2 steps (v7x dual-TC sharding)
    # whenever the batch allows it.
    tm = min(block_rows, max(8, _round_up(pl.cdiv(B, 2), 8)))
    bp = _round_up(B, tm)                     # padded batch
    if bp != B:
        x = jnp.pad(x, ((0, bp - B), (0, 0)))
    grid = (bp // tm,)

    weight_args = (params["w1"], params["b1"], params["w2"], params["b2"],
                   params["w3"], params["b3"])

    def resident(shape):
        # Constant index_map -> weights stay VMEM-resident across grid steps.
        return pl.BlockSpec(shape, lambda i: (0, 0))

    in_specs = [pl.BlockSpec((tm, _IN), lambda i: (i, 0))] + [
        resident(w.shape) for w in weight_args
    ]

    flops = 2 * bp * (_IN * _FEAT + _FEAT * _FEAT + _FEAT * _FEAT)
    bytes_accessed = (bp * _IN * 4
                      + sum(int(w.size) * w.dtype.itemsize for w in weight_args)
                      + bp * 1 * 4)          # narrow (bp, 1) output

    out_padded = pl.pallas_call(
        discriminator_kernel,
        out_shape=jax.ShapeDtypeStruct((bp, 1), jnp.float32),
        grid=grid,
        in_specs=in_specs,
        out_specs=pl.BlockSpec((tm, 1), lambda i: (i, 0)),
        compiler_params=pltpu.CompilerParams(
            dimension_semantics=("parallel",),
            vmem_limit_bytes=32 * 1024 * 1024),
        cost_estimate=pl.CostEstimate(
            flops=flops,
            transcendentals=2 * bp,          # one exp + one reciprocal per row
            bytes_accessed=bytes_accessed),
    )(x, *weight_args)

    # Drop batch padding only; output is already 1 column wide.
    return out_padded[:B]


def init_params(key):
    """Deterministic init matching the PyTorch layer shapes.

    PyTorch nn.Linear stores weight as (out, in); we store (in, out), zero-pad
    every feature dim to 128, and keep MXU-bound weights in bf16.
    """
    k1, k2, k3, k4, k5, k6 = jax.random.split(key, 6)

    def uinit(k, shape, fan_in):
        bound = 1.0 / jnp.sqrt(fan_in)
        return jax.random.uniform(k, shape, jnp.float32, -bound, bound)

    w1 = uinit(k1, (2, 100), 2)
    b1 = uinit(k2, (1, 100), 2)
    w2 = uinit(k3, (100, 100), 100)
    b2 = uinit(k4, (1, 100), 100)
    w3 = uinit(k5, (100, 1), 100)
    b3 = uinit(k6, (1, 1), 100)

    def pad(a, rows, cols):
        return jnp.pad(a, ((0, rows - a.shape[0]), (0, cols - a.shape[1])))

    return {
        "w1": pad(w1, _IN, _FEAT),                         # f32: layer-1 VPU path
        "b1": pad(b1, 1, _FEAT),
        "w2": pad(w2, _FEAT, _FEAT).astype(jnp.bfloat16),  # MXU operand
        "b2": pad(b2, 1, _FEAT),
        "w3": pad(w3, _FEAT, _FEAT).astype(jnp.bfloat16),  # MXU operand
        "b3": pad(b3, 1, _FEAT),
    }


def reference_forward(x, params):
    """Plain-JAX reference with the same bf16-operand / f32-accum math."""
    # TODO(synk): bf16 MXU operands deviate ~1e-3 from a pure-f32 PyTorch
    # Discriminator; acceptable for inference under the 5e-3 tolerance.
    w1, b1 = params["w1"], params["b1"]
    h1 = _leaky_relu(x[:, 0:1] * w1[0:1, :] + x[:, 1:2] * w1[1:2, :] + b1)
    h2 = _leaky_relu(jnp.dot(h1.astype(jnp.bfloat16), params["w2"],
                             preferred_element_type=jnp.float32) + params["b2"])
    h3 = jnp.dot(h2.astype(jnp.bfloat16), params["w3"],
                 preferred_element_type=jnp.float32) + params["b3"]
    return jax.nn.sigmoid(h3)[:, :1]


if __name__ == "__main__":
    key = jax.random.PRNGKey(0)
    pkey, xkey = jax.random.split(key)

    params = init_params(pkey)
    x = jax.random.normal(xkey, (8, 2), dtype=jnp.float32)  # batch=8, in=2

    out = discriminator_forward(x, params)
    jax.block_until_ready(out)

    ref = reference_forward(x, params)
    assert out.shape == (8, 1)
    assert jnp.allclose(out, ref, atol=5e-3, rtol=5e-3), float(
        jnp.max(jnp.abs(out - ref)))

    print("KERNEL_OK")
</pallas_src>

<mosaic_0001>
module attributes {stable_mosaic.version = 11 : i64} {
  func.func @discriminator_kernel(%arg0: i32, %arg1: memref<8x2xf32, #tpu.memory_space<vmem>>, %arg2: memref<2x128xf32, #tpu.memory_space<vmem>>, %arg3: memref<1x128xf32, #tpu.memory_space<vmem>>, %arg4: memref<128x128xbf16, #tpu.memory_space<vmem>>, %arg5: memref<1x128xf32, #tpu.memory_space<vmem>>, %arg6: memref<128x128xbf16, #tpu.memory_space<vmem>>, %arg7: memref<1x128xf32, #tpu.memory_space<vmem>>, %arg8: memref<8x1xf32, #tpu.memory_space<vmem>>) attributes {dimension_semantics = [#tpu.dimension_semantics<parallel>], iteration_bounds = array<i64: 1>, scalar_prefetch = 0 : i64, scratch_operands = 0 : i64, tpu.core_type = #tpu.core_type<tc>, window_params = [{transform_indices = @transform_0, window_bounds = array<i64: 8, 2>}, {pipeline_mode = #tpu.pipeline_mode<synchronous>, transform_indices = @transform_1, window_bounds = array<i64: 2, 128>}, {pipeline_mode = #tpu.pipeline_mode<synchronous>, transform_indices = @transform_2, window_bounds = array<i64: 1, 128>}, {pipeline_mode = #tpu.pipeline_mode<synchronous>, transform_indices = @transform_3, window_bounds = array<i64: 128, 128>}, {pipeline_mode = #tpu.pipeline_mode<synchronous>, transform_indices = @transform_4, window_bounds = array<i64: 1, 128>}, {pipeline_mode = #tpu.pipeline_mode<synchronous>, transform_indices = @transform_5, window_bounds = array<i64: 128, 128>}, {pipeline_mode = #tpu.pipeline_mode<synchronous>, transform_indices = @transform_6, window_bounds = array<i64: 1, 128>}, {transform_indices = @transform_7, window_bounds = array<i64: 8, 1>}]} {
    %c0 = arith.constant 0 : index
    %c0_0 = arith.constant 0 : index
    %0 = vector.load %arg1[%c0, %c0_0] : memref<8x2xf32, #tpu.memory_space<vmem>>, vector<8x2xf32>
    %c0_1 = arith.constant 0 : index
    %c0_2 = arith.constant 0 : index
    %1 = vector.load %arg2[%c0_1, %c0_2] : memref<2x128xf32, #tpu.memory_space<vmem>>, vector<2x128xf32>
    %2 = vector.extract_strided_slice %0 {offsets = [0, 0], sizes = [8, 1], strides = [1, 1]} : vector<8x2xf32> to vector<8x1xf32>
    %3 = vector.extract_strided_slice %1 {offsets = [0, 0], sizes = [1, 128], strides = [1, 1]} : vector<2x128xf32> to vector<1x128xf32>
    %4 = vector.broadcast %2 : vector<8x1xf32> to vector<8x128xf32>
    %5 = vector.broadcast %3 : vector<1x128xf32> to vector<8x128xf32>
    %6 = arith.mulf %4, %5 : vector<8x128xf32>
    %7 = vector.extract_strided_slice %0 {offsets = [0, 1], sizes = [8, 1], strides = [1, 1]} : vector<8x2xf32> to vector<8x1xf32>
    %8 = vector.extract_strided_slice %1 {offsets = [1, 0], sizes = [1, 128], strides = [1, 1]} : vector<2x128xf32> to vector<1x128xf32>
    %9 = vector.broadcast %7 : vector<8x1xf32> to vector<8x128xf32>
    %10 = vector.broadcast %8 : vector<1x128xf32> to vector<8x128xf32>
    %11 = arith.mulf %9, %10 : vector<8x128xf32>
    %12 = arith.addf %6, %11 : vector<8x128xf32>
    %c0_3 = arith.constant 0 : index
    %c0_4 = arith.constant 0 : index
    %13 = vector.load %arg3[%c0_3, %c0_4] : memref<1x128xf32, #tpu.memory_space<vmem>>, vector<1x128xf32>
    %14 = vector.broadcast %13 : vector<1x128xf32> to vector<8x128xf32>
    %15 = arith.addf %12, %14 : vector<8x128xf32>
    %cst = arith.constant 0.00999999977 : f32
    %16 = vector.broadcast %cst : f32 to vector<8x128xf32>
    %17 = arith.mulf %16, %15 : vector<8x128xf32>
    %18 = arith.maximumf %15, %17 : vector<8x128xf32>
    %19 = arith.truncf %18 : vector<8x128xf32> to vector<8x128xbf16>
    %c0_5 = arith.constant 0 : index
    %c0_6 = arith.constant 0 : index
    %20 = vector.load %arg4[%c0_5, %c0_6] : memref<128x128xbf16, #tpu.memory_space<vmem>>, vector<128x128xbf16>
    %cst_7 = arith.constant dense<0.000000e+00> : vector<8x128xf32>
    %21 = tpu.matmul %19, %20, %cst_7 {dimension_numbers = #tpu.dot_dimension_numbers<[1], [0], [0], [1], [0, 0, 1, 1], [], []>} : vector<8x128xbf16>, vector<128x128xbf16>, vector<8x128xf32> -> vector<8x128xf32>
    %c0_8 = arith.constant 0 : index
    %c0_9 = arith.constant 0 : index
    %22 = vector.load %arg5[%c0_8, %c0_9] : memref<1x128xf32, #tpu.memory_space<vmem>>, vector<1x128xf32>
    %23 = vector.broadcast %22 : vector<1x128xf32> to vector<8x128xf32>
    %24 = arith.addf %21, %23 : vector<8x128xf32>
    %cst_10 = arith.constant 0.00999999977 : f32
    %25 = vector.broadcast %cst_10 : f32 to vector<8x128xf32>
    %26 = arith.mulf %25, %24 : vector<8x128xf32>
    %27 = arith.maximumf %24, %26 : vector<8x128xf32>
    %28 = arith.truncf %27 : vector<8x128xf32> to vector<8x128xbf16>
    %c0_11 = arith.constant 0 : index
    %c0_12 = arith.constant 0 : index
    %29 = vector.load %arg6[%c0_11, %c0_12] : memref<128x128xbf16, #tpu.memory_space<vmem>>, vector<128x128xbf16>
    %cst_13 = arith.constant dense<0.000000e+00> : vector<8x128xf32>
    %30 = tpu.matmul %28, %29, %cst_13 {dimension_numbers = #tpu.dot_dimension_numbers<[1], [0], [0], [1], [0, 0, 1, 1], [], []>} : vector<8x128xbf16>, vector<128x128xbf16>, vector<8x128xf32> -> vector<8x128xf32>
    %c0_14 = arith.constant 0 : index
    %c0_15 = arith.constant 0 : index
    %31 = vector.load %arg7[%c0_14, %c0_15] : memref<1x128xf32, #tpu.memory_space<vmem>>, vector<1x128xf32>
    %32 = vector.broadcast %31 : vector<1x128xf32> to vector<8x128xf32>
    %33 = arith.addf %30, %32 : vector<8x128xf32>
    %34 = vector.extract_strided_slice %33 {offsets = [0, 0], sizes = [8, 1], strides = [1, 1]} : vector<8x128xf32> to vector<8x1xf32>
    %cst_16 = arith.constant 0.000000e+00 : f32
    %35 = vector.broadcast %cst_16 : f32 to vector<8x1xf32>
    %36 = arith.subf %35, %34 : vector<8x1xf32>
    %37 = math.exp %36 : vector<8x1xf32>
    %cst_17 = arith.constant 1.000000e+00 : f32
    %38 = vector.broadcast %cst_17 : f32 to vector<8x1xf32>
    %39 = arith.addf %38, %37 : vector<8x1xf32>
    %40 = tpu.reciprocal %39 {approx = true} : vector<8x1xf32> -> vector<8x1xf32>
    %c0_18 = arith.constant 0 : index
    %c0_19 = arith.constant 0 : index
    %41 = vector.load %arg8[%c0_18, %c0_19] : memref<8x1xf32, #tpu.memory_space<vmem>>, vector<8x1xf32>
    tpu.vector_store %arg8[%c0_18, %c0_19], %40 {strides = array<i32>} : memref<8x1xf32, #tpu.memory_space<vmem>>, vector<8x1xf32>,
    return
  }
  func.func @transform_0(%arg0: i32) -> (i32, i32) {
    %c0_i32 = arith.constant 0 : i32
    %c0_i32_0 = arith.constant 0 : i32
    return %arg0, %c0_i32 : i32, i32
  }
  func.func @transform_1(%arg0: i32) -> (i32, i32) {
    %c0_i32 = arith.constant 0 : i32
    %c0_i32_0 = arith.constant 0 : i32
    %c0_i32_1 = arith.constant 0 : i32
    return %c0_i32, %c0_i32_0 : i32, i32
  }
  func.func @transform_2(%arg0: i32) -> (i32, i32) {
    %c0_i32 = arith.constant 0 : i32
    %c0_i32_0 = arith.constant 0 : i32
    %c0_i32_1 = arith.constant 0 : i32
    return %c0_i32, %c0_i32_0 : i32, i32
  }
  func.func @transform_3(%arg0: i32) -> (i32, i32) {
    %c0_i32 = arith.constant 0 : i32
    %c0_i32_0 = arith.constant 0 : i32
    %c0_i32_1 = arith.constant 0 : i32
    return %c0_i32, %c0_i32_0 : i32, i32
  }
  func.func @transform_4(%arg0: i32) -> (i32, i32) {
    %c0_i32 = arith.constant 0 : i32
    %c0_i32_0 = arith.constant 0 : i32
    %c0_i32_1 = arith.constant 0 : i32
    return %c0_i32, %c0_i32_0 : i32, i32
  }
  func.func @transform_5(%arg0: i32) -> (i32, i32) {
    %c0_i32 = arith.constant 0 : i32
    %c0_i32_0 = arith.constant 0 : i32
    %c0_i32_1 = arith.constant 0 : i32
    return %c0_i32, %c0_i32_0 : i32, i32
  }
  func.func @transform_6(%arg0: i32) -> (i32, i32) {
    %c0_i32 = arith.constant 0 : i32
    %c0_i32_0 = arith.constant 0 : i32
    %c0_i32_1 = arith.constant 0 : i32
    return %c0_i32, %c0_i32_0 : i32, i32
  }
  func.func @transform_7(%arg0: i32) -> (i32, i32) {
    %c0_i32 = arith.constant 0 : i32
    %c0_i32_0 = arith.constant 0 : i32
    return %arg0, %c0_i32 : i32, i32
  }
}

</mosaic_0001>

<llo_original>
// kernel: tpu_custom_call.1
$region0: #{tpu_custom_call.1}
  #allocation0 [shape = 'u32[]', space=smem, size = 0x4, offset = 0x4, fixed_abs, tag = 'smem constant byte address 0x4 - core index']
  #allocation1 [shape = 'u32[144,128]{1,0:T(1,128)}', space=vmem, size = 0x12000, scoped, tag = 'internal scratch']
  %s0 = inlined_call_operand.vmem [shape: f32[8,2], index: 0, kind: input, shape index: {}]
  %s1 = inlined_call_operand.vmem [shape: f32[2,128], index: 1, kind: input, shape index: {}]
  %s2 = inlined_call_operand.vmem [shape: f32[1,128], index: 2, kind: input, shape index: {}]
  %s3 = inlined_call_operand.hbm [shape: bf16[128,128], index: 3, kind: input, shape index: {}]
  %s4 = inlined_call_operand.vmem [shape: f32[1,128], index: 4, kind: input, shape index: {}]
  %s5 = inlined_call_operand.hbm [shape: bf16[128,128], index: 5, kind: input, shape index: {}]
  %s6 = inlined_call_operand.vmem [shape: f32[1,128], index: 6, kind: input, shape index: {}]
  %s7 = inlined_call_operand.vmem [shape: f32[8,1], index: 7, kind: output, shape index: {}]
  %s8 = sld [smem:[#allocation0]]
  $region46: #{tpu_custom_call.1} parent=0
    _
  %s10 = ssub.s32 1, %s8
  %s11 = scalar_select 0, %s10, %s8
  $region1: #{tpu_custom_call.1} parent=0
    #allocation2 [shape = 'u8[32768]{0}', space=vmem, size = 0x8000, scoped, tag = 'input window, operand 3, single buffered']
    #allocation3 [shape = 's32[1]{0}', space=sflag, size = 0x4, scoped, tag = 'scoped memory for tpu_custom_call.1']
    #allocation4 [shape = 'u8[32768]{0}', space=vmem, size = 0x8000, scoped, tag = 'input window, operand 5, single buffered']
    #allocation5 [shape = 's32[1]{0}', space=sflag, size = 0x4, scoped, tag = 'scoped memory for tpu_custom_call.1']
    %12 = vsyncpa [#allocation3], 0
    %13 = vsyncpa [#allocation5], 0
    // Predicated region
    $region2: #{tpu_custom_call.1} parent=1 // pred_check
      _
    $region3: #{tpu_custom_call.1} parent=1 // pred_check_branch
      %15 = sbr.rel (0) target = $region5
    $region4: #{tpu_custom_call.1} parent=1 // pred_region
      _
    $region5: #{tpu_custom_call.1} parent=1 // pred_fallthru
      _
    // Predicated region
    $region6: #{tpu_custom_call.1} parent=1 // pred_check
      _
    $region7: #{tpu_custom_call.1} parent=1 // pred_check_branch
      %17 = sbr.rel (0) target = $region9
    $region8: #{tpu_custom_call.1} parent=1 // pred_region
      _
    $region9: #{tpu_custom_call.1} parent=1 // pred_fallthru
      _
    // Predicated region
    $region10: #{tpu_custom_call.1} parent=1 // pred_check
      _
    $region11: #{tpu_custom_call.1} parent=1 // pred_check_branch
      %19 = sbr.rel (0) target = $region13
    $region12: #{tpu_custom_call.1} parent=1 // pred_region
      _
    $region13: #{tpu_custom_call.1} parent=1 // pred_fallthru
      _
    // Predicated region
    $region14: #{tpu_custom_call.1} parent=1 // pred_check
      _
    $region15: #{tpu_custom_call.1} parent=1 // pred_check_branch
      %21 = sbr.rel (0) target = $region17
    $region16: #{tpu_custom_call.1} parent=1 // pred_region
      %s23 = ssub.s32 1024, 1024
      %24 = vsyncadd [#allocation3], %s23
      %s25 = sshll.u32 [#allocation2], 4
      %s26 = int_to_ptr.vmem [resolvable:$true] %s25
      %31 = dma.hbm_to_vmem [thread:$0]  %s3, 1024, %s26, [#allocation3], 64, 64, 4
    $region17: #{tpu_custom_call.1} parent=1 // pred_fallthru
      _
    // Predicated region
    $region18: #{tpu_custom_call.1} parent=1 // pred_check
      _
    $region19: #{tpu_custom_call.1} parent=1 // pred_check_branch
      %33 = sbr.rel (0) target = $region21
    $region20: #{tpu_custom_call.1} parent=1 // pred_region
      _
    $region21: #{tpu_custom_call.1} parent=1 // pred_fallthru
      _
    // Predicated region
    $region22: #{tpu_custom_call.1} parent=1 // pred_check
      _
    $region23: #{tpu_custom_call.1} parent=1 // pred_check_branch
      %35 = sbr.rel (0) target = $region25
    $region24: #{tpu_custom_call.1} parent=1 // pred_region
      %s37 = ssub.s32 1024, 1024
      %38 = vsyncadd [#allocation5], %s37
      %s39 = sshll.u32 [#allocation4], 4
      %s40 = int_to_ptr.vmem [resolvable:$true] %s39
      %45 = dma.hbm_to_vmem [thread:$0]  %s5, 1024, %s40, [#allocation5], 64, 64, 4
    $region25: #{tpu_custom_call.1} parent=1 // pred_fallthru
      _
    // Predicated region
    $region26: #{tpu_custom_call.1} parent=1 // pred_check
      _
    $region27: #{tpu_custom_call.1} parent=1 // pred_check_branch
      %47 = sbr.rel (0) target = $region29
    $region28: #{tpu_custom_call.1} parent=1 // pred_region
      _
    $region29: #{tpu_custom_call.1} parent=1 // pred_fallthru
      _
    // Predicated region
    $region30: #{tpu_custom_call.1} parent=1 // pred_check
      _
    $region31: #{tpu_custom_call.1} parent=1 // pred_check_branch
      %49 = sbr.rel (0) target = $region33
    $region32: #{tpu_custom_call.1} parent=1 // pred_region
      %50 = dma.done [#allocation3], 1024
    $region33: #{tpu_custom_call.1} parent=1 // pred_fallthru
      _
    // Predicated region
    $region34: #{tpu_custom_call.1} parent=1 // pred_check
      _
    $region35: #{tpu_custom_call.1} parent=1 // pred_check_branch
      %52 = sbr.rel (0) target = $region37
    $region36: #{tpu_custom_call.1} parent=1 // pred_region
      %53 = dma.done [#allocation5], 1024
    $region37: #{tpu_custom_call.1} parent=1 // pred_fallthru
      _
    %v55 = vld [vmem:[%s0] sm:$0xff]
    %v56 = vld [vmem:[%s1] sm:$0x3]
    %58 = vset.pattern.permute.xlu0 0
    %59 = vperm.xlu0 %58, %v55
    %v60 = vpop.permute.xlu0 %59
    %v62 = vlaneseq
    %v63 = vshrl.u32 %v62, 7
    %v64 = vsub.s32 0, %v63
    %v65 = vrot.slane %v56, %v64
    %v66 = vmul.f32 %v60, %v65
    %67 = vset.pattern.permute.xlu0 1
    %68 = vperm.xlu0 %67, %v55
    %v69 = vpop.permute.xlu0 %68
    %v71 = vlaneseq
    %v72 = vshrl.u32 %v71, 7
    %v73 = vsub.s32 1, %v72
    %v74 = vrot.slane %v56, %v73
    %v75 = vmul.f32 %v69, %v74
    %v76 = vadd.f32 %v66, %v75
    %v77 = vld [vmem:[%s2] sm:$0x1]
    %v79 = vlaneseq
    %v80 = vshrl.u32 %v79, 7
    %v81 = vsub.s32 0, %v80
    %v82 = vrot.slane %v77, %v81
    %v84 = vadd.f32 %v76, %v82
    %v85 = vmul.f32 %v84, 0.01
    %v86 = vmax.f32 %v84, %v85
    %v87 = vpack.c.bf16 %v86, %v86
    %v88 = vld [vmem:[#allocation2] sm:$0xf]
    %v89 = vld [vmem:[#allocation2 + $0x4] sm:$0xf]
    %v90 = vld [vmem:[#allocation2 + $0x8] sm:$0xf]
    %v91 = vld [vmem:[#allocation2 + $0xc] sm:$0xf]
    %v92 = vld [vmem:[#allocation2 + $0x10] sm:$0xf]
    %v93 = vld [vmem:[#allocation2 + $0x14] sm:$0xf]
    %v94 = vld [vmem:[#allocation2 + $0x18] sm:$0xf]
    %v95 = vld [vmem:[#allocation2 + $0x1c] sm:$0xf]
    %v96 = vld [vmem:[#allocation2 + $0x20] sm:$0xf]
    %v97 = vld [vmem:[#allocation2 + $0x24] sm:$0xf]
    %v98 = vld [vmem:[#allocation2 + $0x28] sm:$0xf]
    %v99 = vld [vmem:[#allocation2 + $0x2c] sm:$0xf]
    %v100 = vld [vmem:[#allocation2 + $0x30] sm:$0xf]
    %v101 = vld [vmem:[#allocation2 + $0x34] sm:$0xf]
    %v102 = vld [vmem:[#allocation2 + $0x38] sm:$0xf]
    %v103 = vld [vmem:[#allocation2 + $0x3c] sm:$0xf]
    %v104 = vld [vmem:[%s4] sm:$0x1]
    %v106 = vlaneseq
    %v107 = vshrl.u32 %v106, 7
    %v108 = vsub.s32 0, %v107
    %v109 = vrot.slane %v104, %v108
    %v127 = vunpack.c.l.b16 %v88
    %v128 = vunpack.c.l.b16 %v89
    %v129 = vunpack.c.l.b16 %v90
    %v130 = vunpack.c.l.b16 %v91
    %v131 = vunpack.c.l.b16 %v92
    %v132 = vunpack.c.l.b16 %v93
    %v133 = vunpack.c.l.b16 %v94
    %v134 = vunpack.c.l.b16 %v95
    %v135 = vunpack.c.l.b16 %v96
    %v136 = vunpack.c.l.b16 %v97
    %v137 = vunpack.c.l.b16 %v98
    %v138 = vunpack.c.l.b16 %v99
    %v139 = vunpack.c.l.b16 %v100
    %v140 = vunpack.c.l.b16 %v101
    %v141 = vunpack.c.l.b16 %v102
    %v142 = vunpack.c.l.b16 %v103
    %v143 = vpack.c.b16 %v128, %v127
    %v144 = vpack.c.b16 %v130, %v129
    %v145 = vpack.c.b16 %v132, %v131
    %v146 = vpack.c.b16 %v134, %v133
    %v147 = vpack.c.b16 %v136, %v135
    %v148 = vpack.c.b16 %v138, %v137
    %v149 = vpack.c.b16 %v140, %v139
    %v150 = vpack.c.b16 %v142, %v141
    %159 = vmatprep.subr.bf16.mxu0 0
    %160 = vmatpush1.bf16.msra.mxu0 %v143
    %161 = vmatprep.subr.bf16.mxu0 0
    %162 = vmatpush1.bf16.msra.mxu0 %v144
    %163 = vmatprep.subr.bf16.mxu0 0
    %164 = vmatpush1.bf16.msra.mxu0 %v145
    %165 = vmatprep.subr.bf16.mxu0 0
    %166 = vmatpush1.bf16.msra.mxu0 %v146
    %167 = vmatprep.subr.bf16.mxu0 0
    %168 = vmatpush1.bf16.msra.mxu0 %v147
    %169 = vmatprep.subr.bf16.mxu0 0
    %170 = vmatpush1.bf16.msra.mxu0 %v148
    %171 = vmatprep.subr.bf16.mxu0 0
    %172 = vmatpush1.bf16.msra.mxu0 %v149
    %173 = vmatprep.subr.bf16.mxu0 0
    %174 = vmatpush1.bf16.msra.mxu0 %v150
    %175 = vmatprep.subr.bf16.mxu0 0
    %176 = vmatpush1.bf16.msra.mxu0 0
    %177 = vmatprep.subr.bf16.mxu0 0
    %178 = vmatpush1.bf16.msra.mxu0 0
    %179 = vmatprep.subr.bf16.mxu0 0
    %180 = vmatpush1.bf16.msra.mxu0 0
    %181 = vmatprep.subr.bf16.mxu0 0
    %182 = vmatpush1.bf16.msra.mxu0 0
    %183 = vmatprep.subr.bf16.mxu0 0
    %184 = vmatpush1.bf16.msra.mxu0 0
    %185 = vmatprep.subr.bf16.mxu0 0
    %186 = vmatpush1.bf16.msra.mxu0 0
    %187 = vmatprep.subr.bf16.mxu0 0
    %188 = vmatpush1.bf16.msra.mxu0 0
    %189 = vmatprep.subr.bf16.mxu0 0
    %190 = vmatpush1.bf16.msra.mxu0 0
    %191 = vmatprep.mubr.bf16.mxu0 0
    %192 = vmatmul.mubr.bf16.gmra.mrb[0].mxu0 %v87
    %v193 = vpop.f32.mrb[0].mxu0
    %v194 = vadd.f32 %v109, %v193
    %v195 = vpop.f32.mrb[0].mxu0
    %v196 = vpop.f32.mrb[0].mxu0
    %v197 = vpop.f32.mrb[0].mxu0
    %198 = vdwg.mxu0
    %v199 = vmul.f32 %v194, 0.01
    %v200 = vmax.f32 %v194, %v199
    %v201 = vpack.c.bf16 %v200, %v200
    %v202 = vld [vmem:[#allocation4] sm:$0xf]
    %v203 = vld [vmem:[#allocation4 + $0x4] sm:$0xf]
    %v204 = vld [vmem:[#allocation4 + $0x8] sm:$0xf]
    %v205 = vld [vmem:[#allocation4 + $0xc] sm:$0xf]
    %v206 = vld [vmem:[#allocation4 + $0x10] sm:$0xf]
    %v207 = vld [vmem:[#allocation4 + $0x14] sm:$0xf]
    %v208 = vld [vmem:[#allocation4 + $0x18] sm:$0xf]
    %v209 = vld [vmem:[#allocation4 + $0x1c] sm:$0xf]
    %v210 = vld [vmem:[#allocation4 + $0x20] sm:$0xf]
    %v211 = vld [vmem:[#allocation4 + $0x24] sm:$0xf]
    %v212 = vld [vmem:[#allocation4 + $0x28] sm:$0xf]
    %v213 = vld [vmem:[#allocation4 + $0x2c] sm:$0xf]
    %v214 = vld [vmem:[#allocation4 + $0x30] sm:$0xf]
    %v215 = vld [vmem:[#allocation4 + $0x34] sm:$0xf]
    %v216 = vld [vmem:[#allocation4 + $0x38] sm:$0xf]
    %v217 = vld [vmem:[#allocation4 + $0x3c] sm:$0xf]
    %v218 = vld [vmem:[%s6] sm:$0x1]
    %v220 = vlaneseq
    %v221 = vshrl.u32 %v220, 7
    %v222 = vsub.s32 0, %v221
    %v223 = vrot.slane %v218, %v222
    %v241 = vunpack.c.l.b16 %v202
    %v242 = vunpack.c.l.b16 %v203
    %v243 = vunpack.c.l.b16 %v204
    %v244 = vunpack.c.l.b16 %v205
    %v245 = vunpack.c.l.b16 %v206
    %v246 = vunpack.c.l.b16 %v207
    %v247 = vunpack.c.l.b16 %v208
    %v248 = vunpack.c.l.b16 %v209
    %v249 = vunpack.c.l.b16 %v210
    %v250 = vunpack.c.l.b16 %v211
    %v251 = vunpack.c.l.b16 %v212
    %v252 = vunpack.c.l.b16 %v213
    %v253 = vunpack.c.l.b16 %v214
    %v254 = vunpack.c.l.b16 %v215
    %v255 = vunpack.c.l.b16 %v216
    %v256 = vunpack.c.l.b16 %v217
    %v257 = vpack.c.b16 %v242, %v241
    %v258 = vpack.c.b16 %v244, %v243
    %v259 = vpack.c.b16 %v246, %v245
    %v260 = vpack.c.b16 %v248, %v247
    %v261 = vpack.c.b16 %v250, %v249
    %v262 = vpack.c.b16 %v252, %v251
    %v263 = vpack.c.b16 %v254, %v253
    %v264 = vpack.c.b16 %v256, %v255
    %273 = vmatprep.subr.bf16.mxu0 0
    %274 = vmatpush1.bf16.msra.mxu0 %v257
    %275 = vmatprep.subr.bf16.mxu0 0
    %276 = vmatpush1.bf16.msra.mxu0 %v258
    %277 = vmatprep.subr.bf16.mxu0 0
    %278 = vmatpush1.bf16.msra.mxu0 %v259
    %279 = vmatprep.subr.bf16.mxu0 0
    %280 = vmatpush1.bf16.msra.mxu0 %v260
    %281 = vmatprep.subr.bf16.mxu0 0
    %282 = vmatpush1.bf16.msra.mxu0 %v261
    %283 = vmatprep.subr.bf16.mxu0 0
    %284 = vmatpush1.bf16.msra.mxu0 %v262
    %285 = vmatprep.subr.bf16.mxu0 0
    %286 = vmatpush1.bf16.msra.mxu0 %v263
    %287 = vmatprep.subr.bf16.mxu0 0
    %288 = vmatpush1.bf16.msra.mxu0 %v264
    %289 = vmatprep.subr.bf16.mxu0 0
    %290 = vmatpush1.bf16.msra.mxu0 0
    %291 = vmatprep.subr.bf16.mxu0 0
    %292 = vmatpush1.bf16.msra.mxu0 0
    %293 = vmatprep.subr.bf16.mxu0 0
    %294 = vmatpush1.bf16.msra.mxu0 0
    %295 = vmatprep.subr.bf16.mxu0 0
    %296 = vmatpush1.bf16.msra.mxu0 0
    %297 = vmatprep.subr.bf16.mxu0 0
    %298 = vmatpush1.bf16.msra.mxu0 0
    %299 = vmatprep.subr.bf16.mxu0 0
    %300 = vmatpush1.bf16.msra.mxu0 0
    %301 = vmatprep.subr.bf16.mxu0 0
    %302 = vmatpush1.bf16.msra.mxu0 0
    %303 = vmatprep.subr.bf16.mxu0 0
    %304 = vmatpush1.bf16.msra.mxu0 0
    %305 = vmatprep.mubr.bf16.mxu0 0
    %306 = vmatmul.mubr.bf16.gmra.mrb[0].mxu0 %v201
    %v307 = vpop.f32.mrb[0].mxu0
    %v308 = vadd.f32 %v223, %v307
    %v309 = vpop.f32.mrb[0].mxu0
    %v310 = vpop.f32.mrb[0].mxu0
    %v311 = vpop.f32.mrb[0].mxu0
    %312 = vdwg.mxu0
    %v313 = vsub.f32 0.0, %v308
    %v314 = vmul.f32 %v313, 1.442695
    %v315 = vpow.pop %v314
    %v316 = vadd.f32 %v315, 1.0
    %v317 = vrcp.pop %v316
    %vm318 = vcmask 7168
    %319 = vst.msk [vmem:[%s7] sm:$0xff] %vm318, %v317
    // Predicated region
    $region38: #{tpu_custom_call.1} parent=1 // pred_check
      _
    $region39: #{tpu_custom_call.1} parent=1 // pred_check_branch
      %321 = sbr.rel (0) target = $region41
    $region40: #{tpu_custom_call.1} parent=1 // pred_region
      _
    $region41: #{tpu_custom_call.1} parent=1 // pred_fallthru
      _
    // Predicated region
    $region42: #{tpu_custom_call.1} parent=1 // pred_check
      _
    $region43: #{tpu_custom_call.1} parent=1 // pred_check_branch
      %323 = sbr.rel (0) target = $region45
    $region44: #{tpu_custom_call.1} parent=1 // pred_region
      _
    $region45: #{tpu_custom_call.1} parent=1 // pred_fallthru
      _
    %324 = vsyncpa [#allocation3], 1
    %325 = vsyncpa [#allocation5], 1

</llo_original>
